<compile_context>
chip_gen: v6e
topology: v6e:2x2x1
jax: 0.10.0
libtpu: 0.0.40
codegen_flags: <defaults>
</compile_context>

<pallas_src>
import functools

import jax
import jax.numpy as jnp
import numpy as np
from jax import lax
from jax.experimental import pallas as pl
from jax.experimental.pallas import tpu as pltpu


# ----------------------------------------------------------------------------
# Tile / VMEM sizing helpers.
# ----------------------------------------------------------------------------
def _choose_tiles(L):
    """Return (tq, tk, padded_L)."""
    if L <= 256:
        return L, L, L            # single tile, no padding
    tq, tk = 256, 256
    try:
        kind = jax.devices()[0].device_kind.lower()
        if "v5 lite" in kind or "v5e" in kind:
            tq = 128              # v5e MXU is 4x128x128; 128 rows fill it
    except Exception:
        pass
    lp = ((L + 255) // 256) * 256
    return tq, tk, lp


def _vmem_limit(estimate_bytes):
    # 2x headroom for compiler-internal scratch/spills; floor 32 MiB; cap at
    # 64 MiB (v7x physical ceiling; always safe on v5e/v6e's 128 MiB).
    return int(min(64 * 1024 * 1024, max(32 * 1024 * 1024, 2 * estimate_bytes)))


def _proj_vmem_bytes(tr, F):
    dbl = 2
    return dbl * (3 * tr * F * 2        # x tiles (bf16)
                  + 3 * tr * F * 2      # output tiles (bf16)
                  + 3 * F * F * 2       # weights (bf16)
                  + 3 * F * 4)          # biases (f32)


def _attn_vmem_bytes(tq, tk, F, H, D):
    dbl = 2
    io = dbl * (tq * F * 2              # q tile
                + 2 * tk * F * 2        # k/v tiles
                + 2 * tk * 4            # keep/bias
                + F * F * 2 + F * 4     # wo, bo
                + tq * F * 4)           # f32 output tile
    scratch = H * tq * D * (4 + 2) + 2 * H * tq * 128 * 4   # acc + q cache + m/l
    temps = 6 * tq * tk * 4                                  # scores/exp/mask temps
    return io + scratch + temps


# ----------------------------------------------------------------------------
# Pass 1: fused q/k/v linear projections (each token projected exactly once).
# ----------------------------------------------------------------------------
def _qkv_proj_kernel(xq_ref, xk_ref, xv_ref,
                     wq_ref, bq_ref, wk_ref, bk_ref, wv_ref, bv_ref,
                     qp_ref, kp_ref, vp_ref):
    f32 = jnp.float32
    bf16 = jnp.bfloat16
    qp_ref[0] = (jnp.dot(xq_ref[0], wq_ref[...], preferred_element_type=f32)
                 + bq_ref[...]).astype(bf16)
    kp_ref[0] = (jnp.dot(xk_ref[0], wk_ref[...], preferred_element_type=f32)
                 + bk_ref[...]).astype(bf16)
    vp_ref[0] = (jnp.dot(xv_ref[0], wv_ref[...], preferred_element_type=f32)
                 + bv_ref[...]).astype(bf16)


def _project_qkv(xq, xk, xv, wq, bq, wk, bk, wv, bv, *, tile_rows, vmem_limit):
    B, Lp, F = xq.shape
    nr = Lp // tile_rows
    x_spec = pl.BlockSpec((1, tile_rows, F), lambda b, i: (b, i, 0))
    w_spec = pl.BlockSpec((F, F), lambda b, i: (0, 0))
    b_spec = pl.BlockSpec((1, F), lambda b, i: (0, 0))
    out_sds = jax.ShapeDtypeStruct((B, Lp, F), jnp.bfloat16)
    return pl.pallas_call(
        _qkv_proj_kernel,
        out_shape=(out_sds, out_sds, out_sds),
        grid_spec=pltpu.PrefetchScalarGridSpec(
            num_scalar_prefetch=0,
            grid=(B, nr),
            in_specs=[x_spec, x_spec, x_spec,
                      w_spec, b_spec, w_spec, b_spec, w_spec, b_spec],
            out_specs=(x_spec, x_spec, x_spec),
        ),
        compiler_params=pltpu.CompilerParams(
            dimension_semantics=("parallel", "parallel"),
            vmem_limit_bytes=vmem_limit),
    )(xq, xk, xv, wq, bq, wk, bk, wv, bv)


# ----------------------------------------------------------------------------
# Pass 2: flash-style attention over KV tiles + fused output projection.
# ----------------------------------------------------------------------------
def _attention_kernel(q_ref, k_ref, v_ref, keep_ref, bias_ref, wo_ref, bo_ref,
                      out_ref, m_ref, l_ref, acc_ref, qh_ref,
                      *, head_num, head_dim):
    f32 = jnp.float32
    bf16 = jnp.bfloat16
    H, D = head_num, head_dim
    j = pl.program_id(2)
    nkv = pl.num_programs(2)
    TQ = q_ref.shape[1]
    TK = k_ref.shape[1]

    # Init per (batch, query-tile): reset online-softmax state; cache per-head
    # query slices once (lane slicing hoisted out of the kv loop).
    @pl.when(j == 0)
    def _():
        m_ref[...] = jnp.full(m_ref.shape, -jnp.inf, f32)
        l_ref[...] = jnp.zeros(l_ref.shape, f32)
        acc_ref[...] = jnp.zeros(acc_ref.shape, f32)
        q_all = q_ref[0]                               # (TQ, F) bf16, pre-scaled
        for h in range(H):
            qh_ref[h] = q_all[:, h * D:(h + 1) * D]

    k_all = k_ref[0]                                   # (TK, F) bf16
    v_all = v_ref[0]                                   # (TK, F) bf16

    # Mask terms broadcast once (not per head; JAX does not CSE broadcasts).
    keep_b = jnp.broadcast_to(keep_ref[0], (TQ, TK))   # 1.0 keep / 0.0 masked
    bias_b = jnp.broadcast_to(bias_ref[0], (TQ, TK))   # 0 / -1e9 / -1e30 (pad)

    for h in range(H):                                 # static loop over heads
        lo = h * D
        kh = k_all[:, lo:lo + D]                       # (TK, D)
        vh = v_all[:, lo:lo + D]                       # (TK, D)

        # QK^T: contract last dims (no materialized transpose in source).
        s = lax.dot_general(qh_ref[h], kh, (((1,), (1,)), ((), ())),
                            preferred_element_type=f32)          # (TQ, TK)
        s = s * keep_b + bias_b                        # exact masked_fill(-1e9)

        m_prev = m_ref[h]                              # (TQ, 1)
        m_new = jnp.maximum(m_prev, jnp.max(s, axis=-1, keepdims=True))
        alpha = jnp.exp(m_prev - m_new)
        p = jnp.exp(s - m_new)
        l_ref[h] = alpha * l_ref[h] + jnp.sum(p, axis=-1, keepdims=True)
        acc_ref[h] = alpha * acc_ref[h] + jnp.dot(
            p.astype(bf16), vh, preferred_element_type=f32)
        m_ref[h] = m_new

    # Finalize: normalize each head and fold the output projection in as a sum
    # of (TQ,D)@(D,F) products (no context scratch / lane-offset stores).
    @pl.when(j == nkv - 1)
    def _():
        out_ref[0] = jnp.broadcast_to(bo_ref[...], out_ref.shape[1:]).astype(f32)
        for h in range(H):
            inv_l = pl.reciprocal(l_ref[h], approx=True)          # EUP slot
            o_h = (acc_ref[h] * inv_l).astype(bf16)
            out_ref[0] += jnp.dot(o_h, wo_ref[h], preferred_element_type=f32)


def _attention(qp, kp, vp, keep, bias, wo_r, bo, *, head_num, tq, tk, vmem_limit):
    B, Lp, F = qp.shape
    D = F // head_num
    nq, nkv = Lp // tq, Lp // tk
    kernel = functools.partial(_attention_kernel, head_num=head_num, head_dim=D)

    q_spec = pl.BlockSpec((1, tq, F), lambda b, i, j: (b, i, 0))
    kv_spec = pl.BlockSpec((1, tk, F), lambda b, i, j: (b, j, 0))
    msk_spec = pl.BlockSpec((1, 1, tk), lambda b, i, j: (b, 0, j))
    wo_spec = pl.BlockSpec((head_num, D, F), lambda b, i, j: (0, 0, 0))
    bo_spec = pl.BlockSpec((1, F), lambda b, i, j: (0, 0))
    out_spec = pl.BlockSpec((1, tq, F), lambda b, i, j: (b, i, 0))

    return pl.pallas_call(
        kernel,
        out_shape=jax.ShapeDtypeStruct((B, Lp, F), jnp.float32),
        grid_spec=pltpu.PrefetchScalarGridSpec(
            num_scalar_prefetch=0,
            grid=(B, nq, nkv),
            in_specs=[q_spec, kv_spec, kv_spec, msk_spec, msk_spec,
                      wo_spec, bo_spec],
            out_specs=out_spec,
            scratch_shapes=[
                pltpu.VMEM((head_num, tq, 1), jnp.float32),    # m (running max)
                pltpu.VMEM((head_num, tq, 1), jnp.float32),    # l (running denom)
                pltpu.VMEM((head_num, tq, D), jnp.float32),    # per-head context acc
                pltpu.VMEM((head_num, tq, D), jnp.bfloat16),   # per-head q cache
            ],
        ),
        compiler_params=pltpu.CompilerParams(
            dimension_semantics=("parallel", "parallel", "arbitrary"),
            vmem_limit_bytes=vmem_limit),
    )(qp, kp, vp, keep, bias, wo_r, bo)


# ----------------------------------------------------------------------------
# Public wrapper.
# ----------------------------------------------------------------------------
def multi_head_attention(q, k, v, mask, params, *, head_num):
    """q,k,v: (B, L, F) f32; mask: (B, L) int (1=keep, 0=mask); params: dict."""
    B, L, F = q.shape
    assert F % head_num == 0
    D = F // head_num

    tq, tk, Lp = _choose_tiles(L)
    pad = Lp - L

    inv_d = jnp.float32(1.0 / D)   # q*D^-0.5 and logits/sqrt(D) => 1/D total
    wq = (params["wq"] * inv_d).astype(jnp.bfloat16)
    bq = (params["bq"] * inv_d).astype(jnp.float32)
    wk = params["wk"].astype(jnp.bfloat16)
    bk = params["bk"].astype(jnp.float32)
    wv = params["wv"].astype(jnp.bfloat16)
    bv = params["bv"].astype(jnp.float32)
    wo_r = params["wo"].astype(jnp.bfloat16).reshape(head_num, D, F)
    bo = params["bo"].astype(jnp.float32)

    def pad_seq(x):
        return jnp.pad(x, ((0, 0), (0, pad), (0, 0))) if pad else x

    qb = pad_seq(q).astype(jnp.bfloat16)
    kb = pad_seq(k).astype(jnp.bfloat16)
    vb = pad_seq(v).astype(jnp.bfloat16)

    mask_f = mask.astype(jnp.float32)
    keep = mask_f                                   # 1.0 keep / 0.0 masked
    bias = (mask_f - 1.0) * jnp.float32(1e9)        # 0.0 keep / -1e9 masked
    if pad:
        keep = jnp.pad(keep, ((0, 0), (0, pad)))    # padded keys masked
        bias = jnp.pad(bias, ((0, 0), (0, pad)), constant_values=-1e30)
    keep = keep.reshape(B, 1, Lp)
    bias = bias.reshape(B, 1, Lp)

    qp, kp, vp = _project_qkv(
        qb, kb, vb, wq, bq, wk, bk, wv, bv,
        tile_rows=tq, vmem_limit=_vmem_limit(_proj_vmem_bytes(tq, F)))

    out = _attention(
        qp, kp, vp, keep, bias, wo_r, bo,
        head_num=head_num, tq=tq, tk=tk,
        vmem_limit=_vmem_limit(_attn_vmem_bytes(tq, tk, F, head_num, D)))

    return out[:, :L, :] if pad else out


# ----------------------------------------------------------------------------
# Pure-JAX f32 reference (PyTorch forward, eval mode) and test driver.
# ----------------------------------------------------------------------------
def _reference(q, k, v, mask, params, *, head_num):
    B, L, F = q.shape
    D = F // head_num

    def lin(x, w, b):
        return x @ w + b  # w already (in, out)

    def split(x):  # (B, L, F) -> (B, H, L, D)
        return x.reshape(B, L, head_num, D).transpose(0, 2, 1, 3)

    qs = split(lin(q, params["wq"], params["bq"])) * (D ** -0.5)
    ks = split(lin(k, params["wk"], params["bk"]))
    vs = split(lin(v, params["wv"], params["bv"]))
    w = jnp.einsum("bhld,bhmd->bhlm", qs, ks) / jnp.sqrt(jnp.float32(D))
    ext = mask[:, None, None, :]
    w = jnp.where(ext == 0, jnp.float32(-1e9), w)
    w = jax.nn.softmax(w, axis=-1)
    o = jnp.einsum("bhlm,bhmd->bhld", w, vs)
    o = o.transpose(0, 2, 1, 3).reshape(B, L, F)
    return lin(o, params["wo"], params["bo"])


def _run_case(B, L, F, H, seed):
    key = jax.random.PRNGKey(seed)
    keys = jax.random.split(key, 12)
    bound = 1.0 / np.sqrt(F)  # mimic nn.Linear default init range

    def uni(kk, shape):
        return jax.random.uniform(kk, shape, jnp.float32, -bound, bound)

    params = {
        "wq": uni(keys[0], (F, F)), "bq": uni(keys[1], (1, F)),
        "wk": uni(keys[2], (F, F)), "bk": uni(keys[3], (1, F)),
        "wv": uni(keys[4], (F, F)), "bv": uni(keys[5], (1, F)),
        "wo": uni(keys[6], (F, F)), "bo": uni(keys[7], (1, F)),
    }
    q = jax.random.normal(keys[8], (B, L, F), jnp.float32)
    k = jax.random.normal(keys[9], (B, L, F), jnp.float32)
    v = jax.random.normal(keys[10], (B, L, F), jnp.float32)
    # mask: 1 = attend, 0 = masked (last two key positions of batch 1 masked)
    mask = jnp.ones((B, L), jnp.int32).at[1, L - 2:].set(0)

    out = multi_head_attention(q, k, v, mask, params, head_num=H)
    out = jax.block_until_ready(out)
    ref = _reference(q, k, v, mask, params, head_num=H)
    # bf16 matmul inputs + approx reciprocal => relaxed tolerance vs f32 ref.
    np.testing.assert_allclose(np.asarray(out), np.asarray(ref),
                               rtol=2e-2, atol=2e-2)


if __name__ == "__main__":
    _run_case(2, 8, 32, 4, seed=0)     # small, single-tile path
    _run_case(2, 320, 64, 4, seed=1)   # tiled online-softmax + seq padding path
    print("KERNEL_OK")
</pallas_src>

<mosaic_0001>
module attributes {stable_mosaic.version = 11 : i64} {
  func.func @_qkv_proj_kernel(%arg0: i32, %arg1: i32, %arg2: memref<1x8x32xbf16, #tpu.memory_space<vmem>>, %arg3: memref<1x8x32xbf16, #tpu.memory_space<vmem>>, %arg4: memref<1x8x32xbf16, #tpu.memory_space<vmem>>, %arg5: memref<32x32xbf16, #tpu.memory_space<vmem>>, %arg6: memref<1x32xf32, #tpu.memory_space<vmem>>, %arg7: memref<32x32xbf16, #tpu.memory_space<vmem>>, %arg8: memref<1x32xf32, #tpu.memory_space<vmem>>, %arg9: memref<32x32xbf16, #tpu.memory_space<vmem>>, %arg10: memref<1x32xf32, #tpu.memory_space<vmem>>, %arg11: memref<1x8x32xbf16, #tpu.memory_space<vmem>>, %arg12: memref<1x8x32xbf16, #tpu.memory_space<vmem>>, %arg13: memref<1x8x32xbf16, #tpu.memory_space<vmem>>) attributes {dimension_semantics = [#tpu.dimension_semantics<parallel>, #tpu.dimension_semantics<parallel>], iteration_bounds = array<i64: 2, 1>, scalar_prefetch = 0 : i64, scratch_operands = 0 : i64, tpu.core_type = #tpu.core_type<tc>, window_params = [{transform_indices = @transform_0, window_bounds = array<i64: 1, 8, 32>}, {transform_indices = @transform_1, window_bounds = array<i64: 1, 8, 32>}, {transform_indices = @transform_2, window_bounds = array<i64: 1, 8, 32>}, {pipeline_mode = #tpu.pipeline_mode<synchronous>, transform_indices = @transform_3, window_bounds = array<i64: 32, 32>}, {pipeline_mode = #tpu.pipeline_mode<synchronous>, transform_indices = @transform_4, window_bounds = array<i64: 1, 32>}, {pipeline_mode = #tpu.pipeline_mode<synchronous>, transform_indices = @transform_5, window_bounds = array<i64: 32, 32>}, {pipeline_mode = #tpu.pipeline_mode<synchronous>, transform_indices = @transform_6, window_bounds = array<i64: 1, 32>}, {pipeline_mode = #tpu.pipeline_mode<synchronous>, transform_indices = @transform_7, window_bounds = array<i64: 32, 32>}, {pipeline_mode = #tpu.pipeline_mode<synchronous>, transform_indices = @transform_8, window_bounds = array<i64: 1, 32>}, {transform_indices = @transform_9, window_bounds = array<i64: 1, 8, 32>}, {transform_indices = @transform_10, window_bounds = array<i64: 1, 8, 32>}, {transform_indices = @transform_11, window_bounds = array<i64: 1, 8, 32>}]} {
    %c0 = arith.constant 0 : index
    %c0_0 = arith.constant 0 : index
    %c0_1 = arith.constant 0 : index
    %0 = vector.load %arg2[%c0, %c0_0, %c0_1] : memref<1x8x32xbf16, #tpu.memory_space<vmem>>, vector<1x8x32xbf16>
    %1 = vector.shape_cast %0 : vector<1x8x32xbf16> to vector<8x32xbf16>
    %c0_2 = arith.constant 0 : index
    %c0_3 = arith.constant 0 : index
    %2 = vector.load %arg5[%c0_2, %c0_3] : memref<32x32xbf16, #tpu.memory_space<vmem>>, vector<32x32xbf16>
    %cst = arith.constant dense<0.000000e+00> : vector<8x32xf32>
    %3 = tpu.matmul %1, %2, %cst {dimension_numbers = #tpu.dot_dimension_numbers<[1], [0], [0], [1], [0, 0, 1, 1], [], []>} : vector<8x32xbf16>, vector<32x32xbf16>, vector<8x32xf32> -> vector<8x32xf32>
    %c0_4 = arith.constant 0 : index
    %c0_5 = arith.constant 0 : index
    %4 = vector.load %arg6[%c0_4, %c0_5] : memref<1x32xf32, #tpu.memory_space<vmem>>, vector<1x32xf32>
    %5 = vector.broadcast %4 : vector<1x32xf32> to vector<8x32xf32>
    %6 = arith.addf %3, %5 : vector<8x32xf32>
    %7 = arith.truncf %6 : vector<8x32xf32> to vector<8x32xbf16>
    %c0_6 = arith.constant 0 : index
    %c0_7 = arith.constant 0 : index
    %c0_8 = arith.constant 0 : index
    %8 = vector.load %arg11[%c0_6, %c0_7, %c0_8] : memref<1x8x32xbf16, #tpu.memory_space<vmem>>, vector<1x8x32xbf16>
    %9 = vector.shape_cast %8 : vector<1x8x32xbf16> to vector<8x32xbf16>
    %10 = vector.shape_cast %7 : vector<8x32xbf16> to vector<1x8x32xbf16>
    tpu.vector_store %arg11[%c0_6, %c0_7, %c0_8], %10 {strides = array<i32>} : memref<1x8x32xbf16, #tpu.memory_space<vmem>>, vector<1x8x32xbf16>,
    %c0_9 = arith.constant 0 : index
    %c0_10 = arith.constant 0 : index
    %c0_11 = arith.constant 0 : index
    %11 = vector.load %arg3[%c0_9, %c0_10, %c0_11] : memref<1x8x32xbf16, #tpu.memory_space<vmem>>, vector<1x8x32xbf16>
    %12 = vector.shape_cast %11 : vector<1x8x32xbf16> to vector<8x32xbf16>
    %c0_12 = arith.constant 0 : index
    %c0_13 = arith.constant 0 : index
    %13 = vector.load %arg7[%c0_12, %c0_13] : memref<32x32xbf16, #tpu.memory_space<vmem>>, vector<32x32xbf16>
    %cst_14 = arith.constant dense<0.000000e+00> : vector<8x32xf32>
    %14 = tpu.matmul %12, %13, %cst_14 {dimension_numbers = #tpu.dot_dimension_numbers<[1], [0], [0], [1], [0, 0, 1, 1], [], []>} : vector<8x32xbf16>, vector<32x32xbf16>, vector<8x32xf32> -> vector<8x32xf32>
    %c0_15 = arith.constant 0 : index
    %c0_16 = arith.constant 0 : index
    %15 = vector.load %arg8[%c0_15, %c0_16] : memref<1x32xf32, #tpu.memory_space<vmem>>, vector<1x32xf32>
    %16 = vector.broadcast %15 : vector<1x32xf32> to vector<8x32xf32>
    %17 = arith.addf %14, %16 : vector<8x32xf32>
    %18 = arith.truncf %17 : vector<8x32xf32> to vector<8x32xbf16>
    %c0_17 = arith.constant 0 : index
    %c0_18 = arith.constant 0 : index
    %c0_19 = arith.constant 0 : index
    %19 = vector.load %arg12[%c0_17, %c0_18, %c0_19] : memref<1x8x32xbf16, #tpu.memory_space<vmem>>, vector<1x8x32xbf16>
    %20 = vector.shape_cast %19 : vector<1x8x32xbf16> to vector<8x32xbf16>
    %21 = vector.shape_cast %18 : vector<8x32xbf16> to vector<1x8x32xbf16>
    tpu.vector_store %arg12[%c0_17, %c0_18, %c0_19], %21 {strides = array<i32>} : memref<1x8x32xbf16, #tpu.memory_space<vmem>>, vector<1x8x32xbf16>,
    %c0_20 = arith.constant 0 : index
    %c0_21 = arith.constant 0 : index
    %c0_22 = arith.constant 0 : index
    %22 = vector.load %arg4[%c0_20, %c0_21, %c0_22] : memref<1x8x32xbf16, #tpu.memory_space<vmem>>, vector<1x8x32xbf16>
    %23 = vector.shape_cast %22 : vector<1x8x32xbf16> to vector<8x32xbf16>
    %c0_23 = arith.constant 0 : index
    %c0_24 = arith.constant 0 : index
    %24 = vector.load %arg9[%c0_23, %c0_24] : memref<32x32xbf16, #tpu.memory_space<vmem>>, vector<32x32xbf16>
    %cst_25 = arith.constant dense<0.000000e+00> : vector<8x32xf32>
    %25 = tpu.matmul %23, %24, %cst_25 {dimension_numbers = #tpu.dot_dimension_numbers<[1], [0], [0], [1], [0, 0, 1, 1], [], []>} : vector<8x32xbf16>, vector<32x32xbf16>, vector<8x32xf32> -> vector<8x32xf32>
    %c0_26 = arith.constant 0 : index
    %c0_27 = arith.constant 0 : index
    %26 = vector.load %arg10[%c0_26, %c0_27] : memref<1x32xf32, #tpu.memory_space<vmem>>, vector<1x32xf32>
    %27 = vector.broadcast %26 : vector<1x32xf32> to vector<8x32xf32>
    %28 = arith.addf %25, %27 : vector<8x32xf32>
    %29 = arith.truncf %28 : vector<8x32xf32> to vector<8x32xbf16>
    %c0_28 = arith.constant 0 : index
    %c0_29 = arith.constant 0 : index
    %c0_30 = arith.constant 0 : index
    %30 = vector.load %arg13[%c0_28, %c0_29, %c0_30] : memref<1x8x32xbf16, #tpu.memory_space<vmem>>, vector<1x8x32xbf16>
    %31 = vector.shape_cast %30 : vector<1x8x32xbf16> to vector<8x32xbf16>
    %32 = vector.shape_cast %29 : vector<8x32xbf16> to vector<1x8x32xbf16>
    tpu.vector_store %arg13[%c0_28, %c0_29, %c0_30], %32 {strides = array<i32>} : memref<1x8x32xbf16, #tpu.memory_space<vmem>>, vector<1x8x32xbf16>,
    return
  }
  func.func @transform_0(%arg0: i32, %arg1: i32) -> (i32, i32, i32) {
    %c0_i32 = arith.constant 0 : i32
    %c0_i32_0 = arith.constant 0 : i32
    return %arg0, %arg1, %c0_i32 : i32, i32, i32
  }
  func.func @transform_1(%arg0: i32, %arg1: i32) -> (i32, i32, i32) {
    %c0_i32 = arith.constant 0 : i32
    %c0_i32_0 = arith.constant 0 : i32
    return %arg0, %arg1, %c0_i32 : i32, i32, i32
  }
  func.func @transform_2(%arg0: i32, %arg1: i32) -> (i32, i32, i32) {
    %c0_i32 = arith.constant 0 : i32
    %c0_i32_0 = arith.constant 0 : i32
    return %arg0, %arg1, %c0_i32 : i32, i32, i32
  }
  func.func @transform_3(%arg0: i32, %arg1: i32) -> (i32, i32) {
    %c0_i32 = arith.constant 0 : i32
    %c0_i32_0 = arith.constant 0 : i32
    %c0_i32_1 = arith.constant 0 : i32
    return %c0_i32, %c0_i32_0 : i32, i32
  }
  func.func @transform_4(%arg0: i32, %arg1: i32) -> (i32, i32) {
    %c0_i32 = arith.constant 0 : i32
    %c0_i32_0 = arith.constant 0 : i32
    %c0_i32_1 = arith.constant 0 : i32
    return %c0_i32, %c0_i32_0 : i32, i32
  }
  func.func @transform_5(%arg0: i32, %arg1: i32) -> (i32, i32) {
    %c0_i32 = arith.constant 0 : i32
    %c0_i32_0 = arith.constant 0 : i32
    %c0_i32_1 = arith.constant 0 : i32
    return %c0_i32, %c0_i32_0 : i32, i32
  }
  func.func @transform_6(%arg0: i32, %arg1: i32) -> (i32, i32) {
    %c0_i32 = arith.constant 0 : i32
    %c0_i32_0 = arith.constant 0 : i32
    %c0_i32_1 = arith.constant 0 : i32
    return %c0_i32, %c0_i32_0 : i32, i32
  }
  func.func @transform_7(%arg0: i32, %arg1: i32) -> (i32, i32) {
    %c0_i32 = arith.constant 0 : i32
    %c0_i32_0 = arith.constant 0 : i32
    %c0_i32_1 = arith.constant 0 : i32
    return %c0_i32, %c0_i32_0 : i32, i32
  }
  func.func @transform_8(%arg0: i32, %arg1: i32) -> (i32, i32) {
    %c0_i32 = arith.constant 0 : i32
    %c0_i32_0 = arith.constant 0 : i32
    %c0_i32_1 = arith.constant 0 : i32
    return %c0_i32, %c0_i32_0 : i32, i32
  }
  func.func @transform_9(%arg0: i32, %arg1: i32) -> (i32, i32, i32) {
    %c0_i32 = arith.constant 0 : i32
    %c0_i32_0 = arith.constant 0 : i32
    return %arg0, %arg1, %c0_i32 : i32, i32, i32
  }
  func.func @transform_10(%arg0: i32, %arg1: i32) -> (i32, i32, i32) {
    %c0_i32 = arith.constant 0 : i32
    %c0_i32_0 = arith.constant 0 : i32
    return %arg0, %arg1, %c0_i32 : i32, i32, i32
  }
  func.func @transform_11(%arg0: i32, %arg1: i32) -> (i32, i32, i32) {
    %c0_i32 = arith.constant 0 : i32
    %c0_i32_0 = arith.constant 0 : i32
    return %arg0, %arg1, %c0_i32 : i32, i32, i32
  }
}

</mosaic_0001>

<llo_original>
// kernel: tpu_custom_call.1
$region0: #{tpu_custom_call.1}
  #allocation0 [shape = 'u32[]', space=smem, size = 0x4, offset = 0x4, fixed_abs, tag = 'smem constant byte address 0x4 - core index']
  #allocation1 [shape = 'u32[144,128]{1,0:T(1,128)}', space=vmem, size = 0x12000, scoped, tag = 'internal scratch']
  %s0 = inlined_call_operand.hbm [shape: bf16[2,8,32], index: 0, kind: input, shape index: {}]
  %s1 = inlined_call_operand.hbm [shape: bf16[2,8,32], index: 1, kind: input, shape index: {}]
  %s2 = inlined_call_operand.hbm [shape: bf16[2,8,32], index: 2, kind: input, shape index: {}]
  %s3 = inlined_call_operand.hbm [shape: bf16[32,32], index: 3, kind: input, shape index: {}]
  %s4 = inlined_call_operand.vmem [shape: f32[1,32], index: 4, kind: input, shape index: {}]
  %s5 = inlined_call_operand.hbm [shape: bf16[32,32], index: 5, kind: input, shape index: {}]
  %s6 = inlined_call_operand.vmem [shape: f32[1,32], index: 6, kind: input, shape index: {}]
  %s7 = inlined_call_operand.hbm [shape: bf16[32,32], index: 7, kind: input, shape index: {}]
  %s8 = inlined_call_operand.vmem [shape: f32[1,32], index: 8, kind: input, shape index: {}]
  %s9 = inlined_call_operand.hbm [shape: bf16[2,8,32], index: 9, kind: output, shape index: {0}]
  %s10 = inlined_call_operand.hbm [shape: bf16[2,8,32], index: 10, kind: output, shape index: {1}]
  %s11 = inlined_call_operand.hbm [shape: bf16[2,8,32], index: 11, kind: output, shape index: {2}]
  %12 = xla_tuple %s9, %s10, %s11
  %s13 = sld [smem:[#allocation0]]
  $region109: #{tpu_custom_call.1} parent=0
    _
  %s15 = ssub.s32 1, %s13
  %s16 = scalar_select 0, %s15, %s13
  $region1: #{tpu_custom_call.1} parent=0
    #allocation2 [shape = 'u8[4096]{0}', space=vmem, size = 0x1000, scoped, tag = 'input window, operand 0']
    #allocation3 [shape = 's32[2]{0}', space=sflag, size = 0x8, scoped, tag = 'scoped memory for tpu_custom_call.1']
    #allocation4 [shape = 's32[2]{0}', space=sflag, size = 0x8, scoped, tag = 'scoped memory for tpu_custom_call.1']
    #allocation5 [shape = 'u8[4096]{0}', space=vmem, size = 0x1000, scoped, tag = 'input window, operand 1']
    #allocation6 [shape = 's32[2]{0}', space=sflag, size = 0x8, scoped, tag = 'scoped memory for tpu_custom_call.1']
    #allocation7 [shape = 'u8[4096]{0}', space=vmem, size = 0x1000, scoped, tag = 'input window, operand 2']
    #allocation8 [shape = 'u8[8192]{0}', space=vmem, size = 0x2000, scoped, tag = 'input window, operand 3, single buffered']
    #allocation9 [shape = 's32[1]{0}', space=sflag, size = 0x4, scoped, tag = 'scoped memory for tpu_custom_call.1']
    #allocation10 [shape = 'u8[8192]{0}', space=vmem, size = 0x2000, scoped, tag = 'input window, operand 5, single buffered']
    #allocation11 [shape = 'u8[8192]{0}', space=vmem, size = 0x2000, scoped, tag = 'input window, operand 7, single buffered']
    #allocation12 [shape = 's32[1]{0}', space=sflag, size = 0x4, scoped, tag = 'scoped memory for tpu_custom_call.1']
    #allocation13 [shape = 'u8[4096]{0}', space=vmem, size = 0x1000, scoped, tag = 'output window, operand 0']
    #allocation14 [shape = 'u8[4096]{0}', space=vmem, size = 0x1000, scoped, tag = 'output window, operand 1']
    #allocation15 [shape = 's32[2]{0}', space=sflag, size = 0x8, scoped, tag = 'scoped memory for tpu_custom_call.1']
    #allocation16 [shape = 'u8[4096]{0}', space=vmem, size = 0x1000, scoped, tag = 'output window, operand 2']
    %17 = vsyncpa [#allocation3], 0
    %s18 = scalar_lea.sflag [#allocation3], 1
    %19 = vsyncpa %s18, 0
    %20 = vsyncpa [#allocation6], 0
    %s21 = scalar_lea.sflag [#allocation6], 1
    %22 = vsyncpa %s21, 0
    %23 = vsyncpa [#allocation9], 0
    %24 = vsyncpa [#allocation12], 0
    %25 = vsyncpa [#allocation4], 0
    %s26 = scalar_lea.sflag [#allocation4], 1
    %27 = vsyncpa %s26, 0
    %28 = vsyncpa [#allocation15], 0
    %s29 = scalar_lea.sflag [#allocation15], 1
    %30 = vsyncpa %s29, 0
    loop: start=0, step=1, limit=4
    $region2: #{tpu_custom_call.1} parent=1 // loop_pre_header
      _
    $region3: #{tpu_custom_call.1} parent=1 // loop_header
      %s32 = sphi 0, %s36
      %p33 = scmp.ge.s32.totalorder %s32, 4
      %s39 = sphi 0, %s51
      %s40 = sphi 0, %s47
      %s41 = sphi 0, %s39
      %s42 = sphi 0, %s40
      %s43 = sphi 0, %s41
      %s44 = sphi 0, %s42
      %s56 = sphi 0, %s58
      %s59 = sphi 0, %s56
      %s60 = sphi 0, %s59
      %s76 = sphi 0, %s60
      %s84 = sphi 0, %s86
      %s87 = sphi 0, %s84
      %s88 = sphi 0, %s87
      %s104 = sphi 0, %s88
      %s112 = sphi 0, %s114
      %s115 = sphi 0, %s112
      %s116 = sphi 0, %s115
      %s132 = sphi 0, %s116
      %s136 = sphi 0, %s136
      %s138 = sphi 0, %s136
      %s139 = sphi 0, %s138
      %s153 = sphi 0, %s139
      %s157 = sphi 0, %s157
      %s159 = sphi 0, %s157
      %s160 = sphi 0, %s159
      %s174 = sphi 0, %s160
      %s178 = sphi 0, %s178
      %s180 = sphi 0, %s178
      %s181 = sphi 0, %s180
      %s195 = sphi 0, %s181
      %s199 = sphi 0, %s199
      %s201 = sphi 0, %s199
      %s202 = sphi 0, %s201
      %s216 = sphi 0, %s202
      %s220 = sphi 0, %s220
      %s222 = sphi 0, %s220
      %s223 = sphi 0, %s222
      %s237 = sphi 0, %s223
      %s241 = sphi 0, %s241
      %s243 = sphi 0, %s241
      %s244 = sphi 0, %s243
      %s258 = sphi 0, %s244
      %s266 = sphi 0, %s268
      %s269 = sphi 0, %s266
      %s270 = sphi 0, %s269
      %s286 = sphi 0, %s270
      %s294 = sphi 0, %s296
      %s297 = sphi 0, %s294
      %s298 = sphi 0, %s297
      %s314 = sphi 0, %s298
      %s322 = sphi 0, %s324
      %s325 = sphi 0, %s322
      %s326 = sphi 0, %s325
      %s342 = sphi 0, %s326
    $region4: #{tpu_custom_call.1} parent=1 // loop_header_branch
      %35 = sbr.rel (%p33) target = $region8
    $region5: #{tpu_custom_call.1} parent=1 // loop_body
      %s37 = ssub.s32 %s32, 1
      %s38 = ssub.s32 %s32, 2
      %s45 = sadd.s32 1, %s40
      %p46 = scmp.ge.s32.totalorder %s45, 1
      %s47 = scalar_select %p46, 0, %s45
      %s48 = sadd.s32 1, %s39
      %s49 = scalar_select %p46, %s48, %s39
      %p50 = scmp.ge.s32.totalorder %s49, 2
      %s51 = scalar_select %p50, 0, %s49
      %s52 = ssub.s32 %s39, %s51
      %s53 = ssub.s32 %s40, %s47
      %s54 = sor.u32 %s52, %s53
      %p55 = scmp.eq.s32.totalorder %s54, 0
      %s57 = sadd.s32 %s56, 1
      %s58 = scalar_select %p55, %s56, %s57
      %p61 = pneg %p55
      %p62 = scmp.eq.s32.totalorder %s32, 1
      %p63 = por %p61, %p62
      %p64 = scmp.ne.s32.totalorder %s56, %s59
      %p65 = scmp.eq.s32.totalorder %s32, 0
      %p66 = por %p64, %p65
      %p67 = scmp.ne.s32.totalorder %s56, %s59
      %p68 = scmp.eq.s32.totalorder %s37, 1
      %p69 = por %p67, %p68
      %p70 = scmp.ne.s32.totalorder %s59, %s60
      %p71 = scmp.eq.s32.totalorder %s37, 0
      %p72 = por %p70, %p71
      %p73 = scmp.ne.s32.totalorder %s59, %s60
      %p74 = scmp.eq.s32.totalorder %s38, 1
      %p75 = por %p73, %p74
      %p77 = scmp.ne.s32.totalorder %s60, %s76
      %p78 = scmp.eq.s32.totalorder %s38, 0
      %p79 = por %p77, %p78
      %s80 = ssub.s32 %s39, %s51
      %s81 = ssub.s32 %s40, %s47
      %s82 = sor.u32 %s80, %s81
      %p83 = scmp.eq.s32.totalorder %s82, 0
      %s85 = sadd.s32 %s84, 1
      %s86 = scalar_select %p83, %s84, %s85
      %p89 = pneg %p83
      %p90 = scmp.eq.s32.totalorder %s32, 1
      %p91 = por %p89, %p90
      %p92 = scmp.ne.s32.totalorder %s84, %s87
      %p93 = scmp.eq.s32.totalorder %s32, 0
      %p94 = por %p92, %p93
      %p95 = scmp.ne.s32.totalorder %s84, %s87
      %p96 = scmp.eq.s32.totalorder %s37, 1
      %p97 = por %p95, %p96
      %p98 = scmp.ne.s32.totalorder %s87, %s88
      %p99 = scmp.eq.s32.totalorder %s37, 0
      %p100 = por %p98, %p99
      %p101 = scmp.ne.s32.totalorder %s87, %s88
      %p102 = scmp.eq.s32.totalorder %s38, 1
      %p103 = por %p101, %p102
      %p105 = scmp.ne.s32.totalorder %s88, %s104
      %p106 = scmp.eq.s32.totalorder %s38, 0
      %p107 = por %p105, %p106
      %s108 = ssub.s32 %s39, %s51
      %s109 = ssub.s32 %s40, %s47
      %s110 = sor.u32 %s108, %s109
      %p111 = scmp.eq.s32.totalorder %s110, 0
      %s113 = sadd.s32 %s112, 1
      %s114 = scalar_select %p111, %s112, %s113
      %p117 = pneg %p111
      %p118 = scmp.eq.s32.totalorder %s32, 1
      %p119 = por %p117, %p118
      %p120 = scmp.ne.s32.totalorder %s112, %s115
      %p121 = scmp.eq.s32.totalorder %s32, 0
      %p122 = por %p120, %p121
      %p123 = scmp.ne.s32.totalorder %s112, %s115
      %p124 = scmp.eq.s32.totalorder %s37, 1
      %p125 = por %p123, %p124
      %p126 = scmp.ne.s32.totalorder %s115, %s116
      %p127 = scmp.eq.s32.totalorder %s37, 0
      %p128 = por %p126, %p127
      %p129 = scmp.ne.s32.totalorder %s115, %s116
      %p130 = scmp.eq.s32.totalorder %s38, 1
      %p131 = por %p129, %p130
      %p133 = scmp.ne.s32.totalorder %s116, %s132
      %p134 = scmp.eq.s32.totalorder %s38, 0
      %p135 = por %p133, %p134
      %s137 = sadd.s32 %s136, 1
      %p140 = scmp.eq.s32.totalorder %s32, 1
      %p141 = scmp.ne.s32.totalorder %s136, %s138
      %p142 = scmp.eq.s32.totalorder %s32, 0
      %p143 = por %p141, %p142
      %p144 = scmp.ne.s32.totalorder %s136, %s138
      %p145 = scmp.eq.s32.totalorder %s37, 1
      %p146 = por %p144, %p145
      %p147 = scmp.ne.s32.totalorder %s138, %s139
      %p148 = scmp.eq.s32.totalorder %s37, 0
      %p149 = por %p147, %p148
      %p150 = scmp.ne.s32.totalorder %s138, %s139
      %p151 = scmp.eq.s32.totalorder %s38, 1
      %p152 = por %p150, %p151
      %p154 = scmp.ne.s32.totalorder %s139, %s153
      %p155 = scmp.eq.s32.totalorder %s38, 0
      %p156 = por %p154, %p155
      %s158 = sadd.s32 %s157, 1
      %p161 = scmp.eq.s32.totalorder %s32, 1
      %p162 = scmp.ne.s32.totalorder %s157, %s159
      %p163 = scmp.eq.s32.totalorder %s32, 0
      %p164 = por %p162, %p163
      %p165 = scmp.ne.s32.totalorder %s157, %s159
      %p166 = scmp.eq.s32.totalorder %s37, 1
      %p167 = por %p165, %p166
      %p168 = scmp.ne.s32.totalorder %s159, %s160
      %p169 = scmp.eq.s32.totalorder %s37, 0
      %p170 = por %p168, %p169
      %p171 = scmp.ne.s32.totalorder %s159, %s160
      %p172 = scmp.eq.s32.totalorder %s38, 1
      %p173 = por %p171, %p172
      %p175 = scmp.ne.s32.totalorder %s160, %s174
      %p176 = scmp.eq.s32.totalorder %s38, 0
      %p177 = por %p175, %p176
      %s179 = sadd.s32 %s178, 1
      %p182 = scmp.eq.s32.totalorder %s32, 1
      %p183 = scmp.ne.s32.totalorder %s178, %s180
      %p184 = scmp.eq.s32.totalorder %s32, 0
      %p185 = por %p183, %p184
      %p186 = scmp.ne.s32.totalorder %s178, %s180
      %p187 = scmp.eq.s32.totalorder %s37, 1
      %p188 = por %p186, %p187
      %p189 = scmp.ne.s32.totalorder %s180, %s181
      %p190 = scmp.eq.s32.totalorder %s37, 0
      %p191 = por %p189, %p190
      %p192 = scmp.ne.s32.totalorder %s180, %s181
      %p193 = scmp.eq.s32.totalorder %s38, 1
      %p194 = por %p192, %p193
      %p196 = scmp.ne.s32.totalorder %s181, %s195
      %p197 = scmp.eq.s32.totalorder %s38, 0
      %p198 = por %p196, %p197
      %s200 = sadd.s32 %s199, 1
      %p203 = scmp.eq.s32.totalorder %s32, 1
      %p204 = scmp.ne.s32.totalorder %s199, %s201
      %p205 = scmp.eq.s32.totalorder %s32, 0
      %p206 = por %p204, %p205
      %p207 = scmp.ne.s32.totalorder %s199, %s201
      %p208 = scmp.eq.s32.totalorder %s37, 1
      %p209 = por %p207, %p208
      %p210 = scmp.ne.s32.totalorder %s201, %s202
      %p211 = scmp.eq.s32.totalorder %s37, 0
      %p212 = por %p210, %p211
      %p213 = scmp.ne.s32.totalorder %s201, %s202
      %p214 = scmp.eq.s32.totalorder %s38, 1
      %p215 = por %p213, %p214
      %p217 = scmp.ne.s32.totalorder %s202, %s216
      %p218 = scmp.eq.s32.totalorder %s38, 0
      %p219 = por %p217, %p218
      %s221 = sadd.s32 %s220, 1
      %p224 = scmp.eq.s32.totalorder %s32, 1
      %p225 = scmp.ne.s32.totalorder %s220, %s222
      %p226 = scmp.eq.s32.totalorder %s32, 0
      %p227 = por %p225, %p226
      %p228 = scmp.ne.s32.totalorder %s220, %s222
      %p229 = scmp.eq.s32.totalorder %s37, 1
      %p230 = por %p228, %p229
      %p231 = scmp.ne.s32.totalorder %s222, %s223
      %p232 = scmp.eq.s32.totalorder %s37, 0
      %p233 = por %p231, %p232
      %p234 = scmp.ne.s32.totalorder %s222, %s223
      %p235 = scmp.eq.s32.totalorder %s38, 1
      %p236 = por %p234, %p235
      %p238 = scmp.ne.s32.totalorder %s223, %s237
      %p239 = scmp.eq.s32.totalorder %s38, 0
      %p240 = por %p238, %p239
      %s242 = sadd.s32 %s241, 1
      %p245 = scmp.eq.s32.totalorder %s32, 1
      %p246 = scmp.ne.s32.totalorder %s241, %s243
      %p247 = scmp.eq.s32.totalorder %s32, 0
      %p248 = por %p246, %p247
      %p249 = scmp.ne.s32.totalorder %s241, %s243
      %p250 = scmp.eq.s32.totalorder %s37, 1
      %p251 = por %p249, %p250
      %p252 = scmp.ne.s32.totalorder %s243, %s244
      %p253 = scmp.eq.s32.totalorder %s37, 0
      %p254 = por %p252, %p253
      %p255 = scmp.ne.s32.totalorder %s243, %s244
      %p256 = scmp.eq.s32.totalorder %s38, 1
      %p257 = por %p255, %p256
      %p259 = scmp.ne.s32.totalorder %s244, %s258
      %p260 = scmp.eq.s32.totalorder %s38, 0
      %p261 = por %p259, %p260
      %s262 = ssub.s32 %s39, %s51
      %s263 = ssub.s32 %s40, %s47
      %s264 = sor.u32 %s262, %s263
      %p265 = scmp.eq.s32.totalorder %s264, 0
      %s267 = sadd.s32 %s266, 1
      %s268 = scalar_select %p265, %s266, %s267
      %p271 = pneg %p265
      %p272 = scmp.eq.s32.totalorder %s32, 1
      %p273 = por %p271, %p272
      %p274 = scmp.ne.s32.totalorder %s266, %s269
      %p275 = scmp.eq.s32.totalorder %s32, 0
      %p276 = por %p274, %p275
      %p277 = scmp.ne.s32.totalorder %s266, %s269
      %p278 = scmp.eq.s32.totalorder %s37, 1
      %p279 = por %p277, %p278
      %p280 = scmp.ne.s32.totalorder %s269, %s270
      %p281 = scmp.eq.s32.totalorder %s37, 0
      %p282 = por %p280, %p281
      %p283 = scmp.ne.s32.totalorder %s269, %s270
      %p284 = scmp.eq.s32.totalorder %s38, 1
      %p285 = por %p283, %p284
      %p287 = scmp.ne.s32.totalorder %s270, %s286
      %p288 = scmp.eq.s32.totalorder %s38, 0
      %p289 = por %p287, %p288
      %s290 = ssub.s32 %s39, %s51
      %s291 = ssub.s32 %s40, %s47
      %s292 = sor.u32 %s290, %s291
      %p293 = scmp.eq.s32.totalorder %s292, 0
      %s295 = sadd.s32 %s294, 1
      %s296 = scalar_select %p293, %s294, %s295
      %p299 = pneg %p293
      %p300 = scmp.eq.s32.totalorder %s32, 1
      %p301 = por %p299, %p300
      %p302 = scmp.ne.s32.totalorder %s294, %s297
      %p303 = scmp.eq.s32.totalorder %s32, 0
      %p304 = por %p302, %p303
      %p305 = scmp.ne.s32.totalorder %s294, %s297
      %p306 = scmp.eq.s32.totalorder %s37, 1
      %p307 = por %p305, %p306
      %p308 = scmp.ne.s32.totalorder %s297, %s298
      %p309 = scmp.eq.s32.totalorder %s37, 0
      %p310 = por %p308, %p309
      %p311 = scmp.ne.s32.totalorder %s297, %s298
      %p312 = scmp.eq.s32.totalorder %s38, 1
      %p313 = por %p311, %p312
      %p315 = scmp.ne.s32.totalorder %s298, %s314
      %p316 = scmp.eq.s32.totalorder %s38, 0
      %p317 = por %p315, %p316
      %s318 = ssub.s32 %s39, %s51
      %s319 = ssub.s32 %s40, %s47
      %s320 = sor.u32 %s318, %s319
      %p321 = scmp.eq.s32.totalorder %s320, 0
      %s323 = sadd.s32 %s322, 1
      %s324 = scalar_select %p321, %s322, %s323
      %p327 = pneg %p321
      %p328 = scmp.eq.s32.totalorder %s32, 1
      %p329 = por %p327, %p328
      %p330 = scmp.ne.s32.totalorder %s322, %s325
      %p331 = scmp.eq.s32.totalorder %s32, 0
      %p332 = por %p330, %p331
      %p333 = scmp.ne.s32.totalorder %s322, %s325
      %p334 = scmp.eq.s32.totalorder %s37, 1
      %p335 = por %p333, %p334
      %p336 = scmp.ne.s32.totalorder %s325, %s326
      %p337 = scmp.eq.s32.totalorder %s37, 0
      %p338 = por %p336, %p337
      %p339 = scmp.ne.s32.totalorder %s325, %s326
      %p340 = scmp.eq.s32.totalorder %s38, 1
      %p341 = por %p339, %p340
      %p343 = scmp.ne.s32.totalorder %s326, %s342
      %p344 = scmp.eq.s32.totalorder %s38, 0
      %p345 = por %p343, %p344
      %p346 = scmp.le.s32.totalorder 1, %s32
      %p347 = scmp.lt.s32.totalorder %s32, 3
      %p348 = pnand %p346, %p347
      %p349 = pneg %p348
      // Predicated region
      $region9: #{tpu_custom_call.1} parent=5 // pred_check
        _
      $region10: #{tpu_custom_call.1} parent=5 // pred_check_branch
        %351 = sbr.rel (%p348) target = $region12
      $region11: #{tpu_custom_call.1} parent=5 // pred_region
        %s352 = ssub.s32 %s32, 1
        // Predicated region
        $region13: #{tpu_custom_call.1} parent=11 // pred_check
          %p353 = pneg %p149
        $region14: #{tpu_custom_call.1} parent=11 // pred_check_branch
          %355 = sbr.rel (%p353) target = $region16
        $region15: #{tpu_custom_call.1} parent=11 // pred_region
          %s357 = ssub.s32 256, 256
          %358 = vsyncadd [#allocation9], %s357
          %s359 = sshll.u32 [#allocation8], 4
          %s360 = int_to_ptr.vmem [resolvable:$true] %s359
          %365 = dma.hbm_to_vmem [thread:$0]  %s3, 256, %s360, [#allocation9], 64, 64, 4
        $region16: #{tpu_custom_call.1} parent=11 // pred_fallthru
          _
        // Predicated region
        $region17: #{tpu_custom_call.1} parent=11 // pred_check
          %p366 = pneg %p170
        $region18: #{tpu_custom_call.1} parent=11 // pred_check_branch
          %368 = sbr.rel (%p366) target = $region20
        $region19: #{tpu_custom_call.1} parent=11 // pred_region
          _
        $region20: #{tpu_custom_call.1} parent=11 // pred_fallthru
          _
        // Predicated region
        $region21: #{tpu_custom_call.1} parent=11 // pred_check
          %p369 = pneg %p191
        $region22: #{tpu_custom_call.1} parent=11 // pred_check_branch
          %371 = sbr.rel (%p369) target = $region24
        $region23: #{tpu_custom_call.1} parent=11 // pred_region
          %s373 = ssub.s32 256, 256
          %374 = vsyncadd [#allocation9], %s373
          %s375 = sshll.u32 [#allocation10], 4
          %s376 = int_to_ptr.vmem [resolvable:$true] %s375
          %381 = dma.hbm_to_vmem [thread:$0]  %s5, 256, %s376, [#allocation9], 64, 64, 4
        $region24: #{tpu_custom_call.1} parent=11 // pred_fallthru
          _
        // Predicated region
        $region25: #{tpu_custom_call.1} parent=11 // pred_check
          %p382 = pneg %p212
        $region26: #{tpu_custom_call.1} parent=11 // pred_check_branch
          %384 = sbr.rel (%p382) target = $region28
        $region27: #{tpu_custom_call.1} parent=11 // pred_region
          _
        $region28: #{tpu_custom_call.1} parent=11 // pred_fallthru
          _
        // Predicated region
        $region29: #{tpu_custom_call.1} parent=11 // pred_check
          %p385 = pneg %p233
        $region30: #{tpu_custom_call.1} parent=11 // pred_check_branch
          %387 = sbr.rel (%p385) target = $region32
        $region31: #{tpu_custom_call.1} parent=11 // pred_region
          %s389 = ssub.s32 256, 256
          %390 = vsyncadd [#allocation12], %s389
          %s391 = sshll.u32 [#allocation11], 4
          %s392 = int_to_ptr.vmem [resolvable:$true] %s391
          %397 = dma.hbm_to_vmem [thread:$0]  %s7, 256, %s392, [#allocation12], 64, 64, 4
        $region32: #{tpu_custom_call.1} parent=11 // pred_fallthru
          _
        // Predicated region
        $region33: #{tpu_custom_call.1} parent=11 // pred_check
          %p398 = pneg %p254
        $region34: #{tpu_custom_call.1} parent=11 // pred_check_branch
          %400 = sbr.rel (%p398) target = $region36
        $region35: #{tpu_custom_call.1} parent=11 // pred_region
          _
        $region36: #{tpu_custom_call.1} parent=11 // pred_fallthru
          _
      $region12: #{tpu_custom_call.1} parent=5 // pred_fallthru
        _
      %p401 = scmp.lt.s32.totalorder %s32, 2
      // Predicated region
      $region37: #{tpu_custom_call.1} parent=5 // pred_check
        %p402 = pneg %p401
      $region38: #{tpu_custom_call.1} parent=5 // pred_check_branch
        %404 = sbr.rel (%p402) target = $region40
      $region39: #{tpu_custom_call.1} parent=5 // pred_region
        // Predicated region
        $region41: #{tpu_custom_call.1} parent=39 // pred_check
          %p405 = pneg %p66
        $region42: #{tpu_custom_call.1} parent=39 // pred_check_branch
          %407 = sbr.rel (%p405) target = $region44
        $region43: #{tpu_custom_call.1} parent=39 // pred_region
          %s408 = sand.u32 %s56, 1
          %s409 = scalar_lea.sflag [#allocation3], %s408
          %s410 = sand.u32 %s56, 1
          %s411 = smul.addr %s410, 4
          %s412 = scalar_lea.vmem [#allocation2], %s411
          %s414 = ssub.s32 64, 64
          %415 = vsyncadd %s409, %s414
          %s416 = sadd.s32 %s40, %s39
          %s417 = smul.addr %s416, 64
          %s418 = scalar_lea.hbm %s0, %s417
          %s420 = sshll.u32 %s412, 4
          %s421 = int_to_ptr.vmem [resolvable:$true] %s420
          %423 = dma.hbm_to_vmem [thread:$0]  %s418, 64, %s421, %s409
        $region44: #{tpu_custom_call.1} parent=39 // pred_fallthru
          _
        // Predicated region
        $region45: #{tpu_custom_call.1} parent=39 // pred_check
          %p424 = pneg %p94
        $region46: #{tpu_custom_call.1} parent=39 // pred_check_branch
          %426 = sbr.rel (%p424) target = $region48
        $region47: #{tpu_custom_call.1} parent=39 // pred_region
          %s427 = sand.u32 %s32, 1
          %s428 = scalar_lea.sflag [#allocation6], %s427
          %s429 = sand.u32 %s84, 1
          %s430 = smul.addr %s429, 4
          %s431 = scalar_lea.vmem [#allocation5], %s430
          %s433 = ssub.s32 64, 64
          %434 = vsyncadd %s428, %s433
          %s435 = sadd.s32 %s40, %s39
          %s436 = smul.addr %s435, 64
          %s437 = scalar_lea.hbm %s1, %s436
          %s439 = sshll.u32 %s431, 4
          %s440 = int_to_ptr.vmem [resolvable:$true] %s439
          %442 = dma.hbm_to_vmem [thread:$0]  %s437, 64, %s440, %s428
        $region48: #{tpu_custom_call.1} parent=39 // pred_fallthru
          _
        // Predicated region
        $region49: #{tpu_custom_call.1} parent=39 // pred_check
          %p443 = pneg %p122
        $region50: #{tpu_custom_call.1} parent=39 // pred_check_branch
          %445 = sbr.rel (%p443) target = $region52
        $region51: #{tpu_custom_call.1} parent=39 // pred_region
          %s446 = sand.u32 %s32, 1
          %s447 = scalar_lea.sflag [#allocation6], %s446
          %s448 = sand.u32 %s112, 1
          %s449 = smul.addr %s448, 4
          %s450 = scalar_lea.vmem [#allocation7], %s449
          %s452 = ssub.s32 64, 64
          %453 = vsyncadd %s447, %s452
          %s454 = sadd.s32 %s40, %s39
          %s455 = smul.addr %s454, 64
          %s456 = scalar_lea.hbm %s2, %s455
          %s458 = sshll.u32 %s450, 4
          %s459 = int_to_ptr.vmem [resolvable:$true] %s458
          %461 = dma.hbm_to_vmem [thread:$0]  %s456, 64, %s459, %s447
        $region52: #{tpu_custom_call.1} parent=39 // pred_fallthru
          _
      $region40: #{tpu_custom_call.1} parent=5 // pred_fallthru
        _
      %p462 = scmp.le.s32.totalorder 1, %s32
      %p463 = scmp.lt.s32.totalorder %s32, 3
      %p464 = pnand %p462, %p463
      %p465 = pneg %p464
      // Predicated region
      $region53: #{tpu_custom_call.1} parent=5 // pred_check
        _
      $region54: #{tpu_custom_call.1} parent=5 // pred_check_branch
        %467 = sbr.rel (%p464) target = $region56
      $region55: #{tpu_custom_call.1} parent=5 // pred_region
        %s468 = ssub.s32 %s32, 1
        %s469 = sand.u32 %s59, 1
        %s470 = scalar_lea.sflag [#allocation3], %s469
        %s471 = sand.u32 %s59, 1
        %s472 = smul.addr %s471, 4
        %s473 = scalar_lea.vmem [#allocation2], %s472
        // Predicated region
        $region57: #{tpu_custom_call.1} parent=55 // pred_check
          %p474 = pneg %p72
        $region58: #{tpu_custom_call.1} parent=55 // pred_check_branch
          %476 = sbr.rel (%p474) target = $region60
        $region59: #{tpu_custom_call.1} parent=55 // pred_region
          %477 = dma.done %s470, 64
        $region60: #{tpu_custom_call.1} parent=55 // pred_fallthru
          _
        %s478 = sand.u32 %s37, 1
        %s479 = scalar_lea.sflag [#allocation6], %s478
        %s480 = sand.u32 %s87, 1
        %s481 = smul.addr %s480, 4
        %s482 = scalar_lea.vmem [#allocation5], %s481
        // Predicated region
        $region61: #{tpu_custom_call.1} parent=55 // pred_check
          %p483 = pneg %p100
        $region62: #{tpu_custom_call.1} parent=55 // pred_check_branch
          %485 = sbr.rel (%p483) target = $region64
        $region63: #{tpu_custom_call.1} parent=55 // pred_region
          %486 = dma.done %s479, 64
        $region64: #{tpu_custom_call.1} parent=55 // pred_fallthru
          _
        %s487 = sand.u32 %s37, 1
        %s488 = scalar_lea.sflag [#allocation6], %s487
        %s489 = sand.u32 %s115, 1
        %s490 = smul.addr %s489, 4
        %s491 = scalar_lea.vmem [#allocation7], %s490
        // Predicated region
        $region65: #{tpu_custom_call.1} parent=55 // pred_check
          %p492 = pneg %p128
        $region66: #{tpu_custom_call.1} parent=55 // pred_check_branch
          %494 = sbr.rel (%p492) target = $region68
        $region67: #{tpu_custom_call.1} parent=55 // pred_region
          %495 = dma.done %s488, 64
        $region68: #{tpu_custom_call.1} parent=55 // pred_fallthru
          _
        // Predicated region
        $region69: #{tpu_custom_call.1} parent=55 // pred_check
          %p496 = pneg %p149
        $region70: #{tpu_custom_call.1} parent=55 // pred_check_branch
          %498 = sbr.rel (%p496) target = $region72
        $region71: #{tpu_custom_call.1} parent=55 // pred_region
          %499 = dma.done [#allocation9], 256
        $region72: #{tpu_custom_call.1} parent=55 // pred_fallthru
          _
        // Predicated region
        $region73: #{tpu_custom_call.1} parent=55 // pred_check
          %p500 = pneg %p191
        $region74: #{tpu_custom_call.1} parent=55 // pred_check_branch
          %502 = sbr.rel (%p500) target = $region76
        $region75: #{tpu_custom_call.1} parent=55 // pred_region
          %503 = dma.done [#allocation9], 256
        $region76: #{tpu_custom_call.1} parent=55 // pred_fallthru
          _
        // Predicated region
        $region77: #{tpu_custom_call.1} parent=55 // pred_check
          %p504 = pneg %p233
        $region78: #{tpu_custom_call.1} parent=55 // pred_check_branch
          %506 = sbr.rel (%p504) target = $region80
        $region79: #{tpu_custom_call.1} parent=55 // pred_region
          %507 = dma.done [#allocation12], 256
        $region80: #{tpu_custom_call.1} parent=55 // pred_fallthru
          _
        %s508 = sand.u32 %s59, 1
        %s509 = scalar_lea.sflag [#allocation3], %s508
        %s510 = sand.u32 %s59, 1
        %s511 = smul.addr %s510, 4
        %s512 = scalar_lea.vmem [#allocation2], %s511
        %p513 = pneg %p72
        %p514 = pneg %p69
        %s515 = sand.u32 %s37, 1
        %s516 = scalar_lea.sflag [#allocation6], %s515
        %s517 = sand.u32 %s87, 1
        %s518 = smul.addr %s517, 4
        %s519 = scalar_lea.vmem [#allocation5], %s518
        %p520 = pneg %p100
        %p521 = pneg %p97
        %s522 = sand.u32 %s37, 1
        %s523 = scalar_lea.sflag [#allocation6], %s522
        %s524 = sand.u32 %s115, 1
        %s525 = smul.addr %s524, 4
        %s526 = scalar_lea.vmem [#allocation7], %s525
        %p527 = pneg %p128
        %p528 = pneg %p125
        %p529 = pneg %p149
        %p530 = pneg %p146
        %p531 = pneg %p170
        %p532 = pneg %p167
        %p533 = pneg %p191
        %p534 = pneg %p188
        %p535 = pneg %p212
        %p536 = pneg %p209
        %p537 = pneg %p233
        %p538 = pneg %p230
        %p539 = pneg %p254
        %p540 = pneg %p251
        %p541 = pneg %p282
        %p542 = pneg %p279
        %s543 = sand.u32 %s269, 1
        %s544 = scalar_lea.sflag [#allocation4], %s543
        %s545 = sand.u32 %s269, 1
        %s546 = smul.addr %s545, 4
        %s547 = scalar_lea.vmem [#allocation13], %s546
        %p548 = pneg %p310
        %p549 = pneg %p307
        %s550 = sand.u32 %s37, 1
        %s551 = scalar_lea.sflag [#allocation15], %s550
        %s552 = sand.u32 %s297, 1
        %s553 = smul.addr %s552, 4
        %s554 = scalar_lea.vmem [#allocation14], %s553
        %p555 = pneg %p338
        %p556 = pneg %p335
        %s557 = sand.u32 %s37, 1
        %s558 = scalar_lea.sflag [#allocation15], %s557
        %s559 = sand.u32 %s325, 1
        %s560 = smul.addr %s559, 4
        %s561 = scalar_lea.vmem [#allocation16], %s560
        %v563 = vld [vmem:[%s473] sm:$0xf]
        %v564 = vld [vmem:[#allocation8] sm:$0xf]
        %v565 = vld [vmem:[#allocation8 + $0x4] sm:$0xf]
        %v566 = vld [vmem:[#allocation8 + $0x8] sm:$0xf]
        %v567 = vld [vmem:[#allocation8 + $0xc] sm:$0xf]
        %v568 = vld [vmem:[%s4] sm:$0x1]
        %v570 = vlaneseq
        %v571 = vshrl.u32 %v570, 7
        %v572 = vsub.s32 0, %v571
        %v573 = vrot.slane %v568, %v572
        %v579 = vunpack.c.l.b16 %v564
        %v580 = vunpack.c.l.b16 %v565
        %v581 = vunpack.c.l.b16 %v566
        %v582 = vunpack.c.l.b16 %v567
        %v583 = vpack.c.b16 %v580, %v579
        %v584 = vpack.c.b16 %v582, %v581
        %vm587 = vcmask 261120
        %v589 = vsel %vm587, %v563, 0
        %591 = vmatprep.subr.bf16.mxu0 0
        %592 = vmatpush1.bf16.msra.mxu0 0
        %593 = vmatprep.subr.bf16.mxu0 0
        %594 = vmatpush1.bf16.msra.mxu0 0
        %595 = vmatprep.subr.bf16.mxu0 0
        %596 = vmatpush1.bf16.msra.mxu0 0
        %597 = vmatprep.subr.bf16.mxu0 0
        %598 = vmatpush1.bf16.msra.mxu0 0
        %599 = vmatprep.subr.bf16.mxu0 0
        %600 = vmatpush1.bf16.msra.mxu0 0
        %601 = vmatprep.subr.bf16.mxu0 0
        %602 = vmatpush1.bf16.msra.mxu0 0
        %603 = vmatprep.subr.bf16.mxu0 0
        %604 = vmatpush1.bf16.msra.mxu0 %v584
        %605 = vmatprep.subr.bf16.mxu0 0
        %606 = vmatpush1.bf16.msra.mxu0 %v583
        %607 = vmatprep.subr.bf16.mxu0 0
        %608 = vmatpush2.bf16.msra.mxu0 0
        %609 = vmatprep.subr.bf16.mxu0 0
        %610 = vmatpush2.bf16.msra.mxu0 0
        %611 = vmatprep.subr.bf16.mxu0 0
        %612 = vmatpush2.bf16.msra.mxu0 0
        %613 = vmatprep.subr.bf16.mxu0 0
        %614 = vmatpush2.bf16.msra.mxu0 0
        %615 = vmatprep.subr.bf16.mxu0 0
        %616 = vmatpush2.bf16.msra.mxu0 0
        %617 = vmatprep.subr.bf16.mxu0 0
        %618 = vmatpush2.bf16.msra.mxu0 0
        %619 = vmatprep.subr.bf16.mxu0 0
        %620 = vmatpush2.bf16.msra.mxu0 0
        %621 = vmatprep.subr.bf16.mxu0 0
        %622 = vmatpush2.bf16.msra.mxu0 0
        %623 = vmatprep.mubr.bf16.mxu0 0
        %624 = vmatmul.mubr.bf16.gmra.mxu0 %v589
        %v625 = vpop.f32.mrf.mxu0
        %v626 = vadd.f32 %v573, %v625
        %v627 = vpop.f32.mrf.mxu0
        %v628 = vpop.f32.mrf.mxu0
        %v629 = vpop.f32.mrf.mxu0
        %630 = vdwg.mxu0
        %v631 = vpack.c.bf16 %v626, %v626
        %vm632 = vcmask 257024
        %633 = vst.msk [vmem:[%s547] sm:$0xf] %vm632, %v631
        %v634 = vld [vmem:[%s482] sm:$0xf]
        %v635 = vld [vmem:[#allocation10] sm:$0xf]
        %v636 = vld [vmem:[#allocation10 + $0x4] sm:$0xf]
        %v637 = vld [vmem:[#allocation10 + $0x8] sm:$0xf]
        %v638 = vld [vmem:[#allocation10 + $0xc] sm:$0xf]
        %v639 = vld [vmem:[%s6] sm:$0x1]
        %v641 = vlaneseq
        %v642 = vshrl.u32 %v641, 7
        %v643 = vsub.s32 0, %v642
        %v644 = vrot.slane %v639, %v643
        %v650 = vunpack.c.l.b16 %v635
        %v651 = vunpack.c.l.b16 %v636
        %v652 = vunpack.c.l.b16 %v637
        %v653 = vunpack.c.l.b16 %v638
        %v654 = vpack.c.b16 %v651, %v650
        %v655 = vpack.c.b16 %v653, %v652
        %v659 = vsel %vm587, %v634, 0
        %661 = vmatprep.subr.bf16.mxu0 0
        %662 = vmatpush1.bf16.msra.mxu0 0
        %663 = vmatprep.subr.bf16.mxu0 0
        %664 = vmatpush1.bf16.msra.mxu0 0
        %665 = vmatprep.subr.bf16.mxu0 0
        %666 = vmatpush1.bf16.msra.mxu0 0
        %667 = vmatprep.subr.bf16.mxu0 0
        %668 = vmatpush1.bf16.msra.mxu0 0
        %669 = vmatprep.subr.bf16.mxu0 0
        %670 = vmatpush1.bf16.msra.mxu0 0
        %671 = vmatprep.subr.bf16.mxu0 0
        %672 = vmatpush1.bf16.msra.mxu0 0
        %673 = vmatprep.subr.bf16.mxu0 0
        %674 = vmatpush1.bf16.msra.mxu0 %v655
        %675 = vmatprep.subr.bf16.mxu0 0
        %676 = vmatpush1.bf16.msra.mxu0 %v654
        %677 = vmatprep.subr.bf16.mxu0 0
        %678 = vmatpush2.bf16.msra.mxu0 0
        %679 = vmatprep.subr.bf16.mxu0 0
        %680 = vmatpush2.bf16.msra.mxu0 0
        %681 = vmatprep.subr.bf16.mxu0 0
        %682 = vmatpush2.bf16.msra.mxu0 0
        %683 = vmatprep.subr.bf16.mxu0 0
        %684 = vmatpush2.bf16.msra.mxu0 0
        %685 = vmatprep.subr.bf16.mxu0 0
        %686 = vmatpush2.bf16.msra.mxu0 0
        %687 = vmatprep.subr.bf16.mxu0 0
        %688 = vmatpush2.bf16.msra.mxu0 0
        %689 = vmatprep.subr.bf16.mxu0 0
        %690 = vmatpush2.bf16.msra.mxu0 0
        %691 = vmatprep.subr.bf16.mxu0 0
        %692 = vmatpush2.bf16.msra.mxu0 0
        %693 = vmatprep.mubr.bf16.mxu0 0
        %694 = vmatmul.mubr.bf16.gmra.mxu0 %v659
        %v695 = vpop.f32.mrf.mxu0
        %v696 = vadd.f32 %v644, %v695
        %v697 = vpop.f32.mrf.mxu0
        %v698 = vpop.f32.mrf.mxu0
        %v699 = vpop.f32.mrf.mxu0
        %700 = vdwg.mxu0
        %v701 = vpack.c.bf16 %v696, %v696
        %702 = vst.msk [vmem:[%s554] sm:$0xf] %vm632, %v701
        %v703 = vld [vmem:[%s491] sm:$0xf]
        %v704 = vld [vmem:[#allocation11] sm:$0xf]
        %v705 = vld [vmem:[#allocation11 + $0x4] sm:$0xf]
        %v706 = vld [vmem:[#allocation11 + $0x8] sm:$0xf]
        %v707 = vld [vmem:[#allocation11 + $0xc] sm:$0xf]
        %v708 = vld [vmem:[%s8] sm:$0x1]
        %v710 = vlaneseq
        %v711 = vshrl.u32 %v710, 7
        %v712 = vsub.s32 0, %v711
        %v713 = vrot.slane %v708, %v712
        %v719 = vunpack.c.l.b16 %v704
        %v720 = vunpack.c.l.b16 %v705
        %v721 = vunpack.c.l.b16 %v706
        %v722 = vunpack.c.l.b16 %v707
        %v723 = vpack.c.b16 %v720, %v719
        %v724 = vpack.c.b16 %v722, %v721
        %v728 = vsel %vm587, %v703, 0
        %730 = vmatprep.subr.bf16.mxu0 0
        %731 = vmatpush1.bf16.msra.mxu0 0
        %732 = vmatprep.subr.bf16.mxu0 0
        %733 = vmatpush1.bf16.msra.mxu0 0
        %734 = vmatprep.subr.bf16.mxu0 0
        %735 = vmatpush1.bf16.msra.mxu0 0
        %736 = vmatprep.subr.bf16.mxu0 0
        %737 = vmatpush1.bf16.msra.mxu0 0
        %738 = vmatprep.subr.bf16.mxu0 0
        %739 = vmatpush1.bf16.msra.mxu0 0
        %740 = vmatprep.subr.bf16.mxu0 0
        %741 = vmatpush1.bf16.msra.mxu0 0
        %742 = vmatprep.subr.bf16.mxu0 0
        %743 = vmatpush1.bf16.msra.mxu0 %v724
        %744 = vmatprep.subr.bf16.mxu0 0
        %745 = vmatpush1.bf16.msra.mxu0 %v723
        %746 = vmatprep.subr.bf16.mxu0 0
        %747 = vmatpush2.bf16.msra.mxu0 0
        %748 = vmatprep.subr.bf16.mxu0 0
        %749 = vmatpush2.bf16.msra.mxu0 0
        %750 = vmatprep.subr.bf16.mxu0 0
        %751 = vmatpush2.bf16.msra.mxu0 0
        %752 = vmatprep.subr.bf16.mxu0 0
        %753 = vmatpush2.bf16.msra.mxu0 0
        %754 = vmatprep.subr.bf16.mxu0 0
        %755 = vmatpush2.bf16.msra.mxu0 0
        %756 = vmatprep.subr.bf16.mxu0 0
        %757 = vmatpush2.bf16.msra.mxu0 0
        %758 = vmatprep.subr.bf16.mxu0 0
        %759 = vmatpush2.bf16.msra.mxu0 0
        %760 = vmatprep.subr.bf16.mxu0 0
        %761 = vmatpush2.bf16.msra.mxu0 0
        %762 = vmatprep.mubr.bf16.mxu0 0
        %763 = vmatmul.mubr.bf16.gmra.mxu0 %v728
        %v764 = vpop.f32.mrf.mxu0
        %v765 = vadd.f32 %v713, %v764
        %v766 = vpop.f32.mrf.mxu0
        %v767 = vpop.f32.mrf.mxu0
        %v768 = vpop.f32.mrf.mxu0
        %769 = vdwg.mxu0
        %v770 = vpack.c.bf16 %v765, %v765
        %771 = vst.msk [vmem:[%s561] sm:$0xf] %vm632, %v770
        %s772 = sand.u32 %s269, 1
        %s773 = scalar_lea.sflag [#allocation4], %s772
        %s774 = sand.u32 %s269, 1
        %s775 = smul.addr %s774, 4
        %s776 = scalar_lea.vmem [#allocation13], %s775
        %s777 = sand.u32 %s37, 1
        %s778 = scalar_lea.sflag [#allocation15], %s777
        %s779 = sand.u32 %s297, 1
        %s780 = smul.addr %s779, 4
        %s781 = scalar_lea.vmem [#allocation14], %s780
        %s782 = sand.u32 %s37, 1
        %s783 = scalar_lea.sflag [#allocation15], %s782
        %s784 = sand.u32 %s325, 1
        %s785 = smul.addr %s784, 4
        %s786 = scalar_lea.vmem [#allocation16], %s785
        // Predicated region
        $region81: #{tpu_custom_call.1} parent=55 // pred_check
          %p787 = pneg %p279
        $region82: #{tpu_custom_call.1} parent=55 // pred_check_branch
          %789 = sbr.rel (%p787) target = $region84
        $region83: #{tpu_custom_call.1} parent=55 // pred_region
          %s791 = ssub.s32 64, 64
          %792 = vsyncadd %s773, %s791
          %s793 = sadd.s32 %s42, %s41
          %s794 = smul.addr %s793, 64
          %s795 = scalar_lea.hbm %s9, %s794
          %s797 = sshll.u32 %s776, 4
          %s798 = int_to_ptr.vmem [resolvable:$true] %s797
          %800 = dma.vmem_to_hbm [thread:$0]  %s798, 64, %s795, %s773
        $region84: #{tpu_custom_call.1} parent=55 // pred_fallthru
          _
        // Predicated region
        $region85: #{tpu_custom_call.1} parent=55 // pred_check
          %p801 = pneg %p307
        $region86: #{tpu_custom_call.1} parent=55 // pred_check_branch
          %803 = sbr.rel (%p801) target = $region88
        $region87: #{tpu_custom_call.1} parent=55 // pred_region
          %s805 = ssub.s32 64, 64
          %806 = vsyncadd %s778, %s805
          %s807 = sadd.s32 %s42, %s41
          %s808 = smul.addr %s807, 64
          %s809 = scalar_lea.hbm %s10, %s808
          %s811 = sshll.u32 %s781, 4
          %s812 = int_to_ptr.vmem [resolvable:$true] %s811
          %814 = dma.vmem_to_hbm [thread:$0]  %s812, 64, %s809, %s778
        $region88: #{tpu_custom_call.1} parent=55 // pred_fallthru
          _
        // Predicated region
        $region89: #{tpu_custom_call.1} parent=55 // pred_check
          %p815 = pneg %p335
        $region90: #{tpu_custom_call.1} parent=55 // pred_check_branch
          %817 = sbr.rel (%p815) target = $region92
        $region91: #{tpu_custom_call.1} parent=55 // pred_region
          %s819 = ssub.s32 64, 64
          %820 = vsyncadd %s783, %s819
          %s821 = sadd.s32 %s42, %s41
          %s822 = smul.addr %s821, 64
          %s823 = scalar_lea.hbm %s11, %s822
          %s825 = sshll.u32 %s786, 4
          %s826 = int_to_ptr.vmem [resolvable:$true] %s825
          %828 = dma.vmem_to_hbm [thread:$0]  %s826, 64, %s823, %s783
        $region92: #{tpu_custom_call.1} parent=55 // pred_fallthru
          _
      $region56: #{tpu_custom_call.1} parent=5 // pred_fallthru
        _
      %p829 = scmp.le.s32.totalorder 2, %s32
      // Predicated region
      $region93: #{tpu_custom_call.1} parent=5 // pred_check
        %p830 = pneg %p829
      $region94: #{tpu_custom_call.1} parent=5 // pred_check_branch
        %832 = sbr.rel (%p830) target = $region96
      $region95: #{tpu_custom_call.1} parent=5 // pred_region
        %s833 = ssub.s32 %s32, 2
        // Predicated region
        $region97: #{tpu_custom_call.1} parent=95 // pred_check
          %p834 = pneg %p285
        $region98: #{tpu_custom_call.1} parent=95 // pred_check_branch
          %836 = sbr.rel (%p834) target = $region100
        $region99: #{tpu_custom_call.1} parent=95 // pred_region
          %s837 = sand.u32 %s270, 1
          %s838 = scalar_lea.sflag [#allocation4], %s837
          %s839 = sand.u32 %s270, 1
          %s840 = smul.addr %s839, 4
          %s841 = scalar_lea.vmem [#allocation13], %s840
          %842 = dma.done %s838, 64
        $region100: #{tpu_custom_call.1} parent=95 // pred_fallthru
          _
        // Predicated region
        $region101: #{tpu_custom_call.1} parent=95 // pred_check
          %p843 = pneg %p313
        $region102: #{tpu_custom_call.1} parent=95 // pred_check_branch
          %845 = sbr.rel (%p843) target = $region104
        $region103: #{tpu_custom_call.1} parent=95 // pred_region
          %s846 = sand.u32 %s38, 1
          %s847 = scalar_lea.sflag [#allocation15], %s846
          %s848 = sand.u32 %s298, 1
          %s849 = smul.addr %s848, 4
          %s850 = scalar_lea.vmem [#allocation14], %s849
          %851 = dma.done %s847, 64
        $region104: #{tpu_custom_call.1} parent=95 // pred_fallthru
          _
        // Predicated region
        $region105: #{tpu_custom_call.1} parent=95 // pred_check
          %p852 = pneg %p341
        $region106: #{tpu_custom_call.1} parent=95 // pred_check_branch
          %854 = sbr.rel (%p852) target = $region108
        $region107: #{tpu_custom_call.1} parent=95 // pred_region
          %s855 = sand.u32 %s38, 1
          %s856 = scalar_lea.sflag [#allocation15], %s855
          %s857 = sand.u32 %s326, 1
          %s858 = smul.addr %s857, 4
          %s859 = scalar_lea.vmem [#allocation16], %s858
          %860 = dma.done %s856, 64
        $region108: #{tpu_custom_call.1} parent=95 // pred_fallthru
          _
      $region96: #{tpu_custom_call.1} parent=5 // pred_fallthru
        _
    $region6: #{tpu_custom_call.1} parent=1 // loop_footer
      %s36 = sadd.s32 1, %s32
    $region7: #{tpu_custom_call.1} parent=1 // loop_footer_branch
      %31 = sbr.rel target = $region3
    $region8: #{tpu_custom_call.1} parent=1 // loop_exit
      _
    %861 = vsyncpa [#allocation3], 1
    %s862 = scalar_lea.sflag [#allocation3], 1
    %863 = vsyncpa %s862, 1
    %864 = vsyncpa [#allocation6], 1
    %s865 = scalar_lea.sflag [#allocation6], 1
    %866 = vsyncpa %s865, 1
    %867 = vsyncpa [#allocation9], 1
    %868 = vsyncpa [#allocation12], 1
    %869 = vsyncpa [#allocation4], 1
    %s870 = scalar_lea.sflag [#allocation4], 1
    %871 = vsyncpa %s870, 1
    %872 = vsyncpa [#allocation15], 1
    %s873 = scalar_lea.sflag [#allocation15], 1
    %874 = vsyncpa %s873, 1

</llo_original>
